<compile_context>
chip_gen: v5e
topology: v5e:2x2
jax: 0.10.0
libtpu: 0.0.40
codegen_flags: <defaults>
</compile_context>

<pallas_src>
import random

import jax
import jax.numpy as jnp
from jax.experimental import pallas as pl
from jax.experimental.pallas import tpu as pltpu


# --------------------------------------------------------------------------- #
# Pallas kernel: fused elementwise mix  out = x + (1 - lmda) * (matched - x)   #
# --------------------------------------------------------------------------- #
def efdmix_mix_kernel(x_ref, m_ref, w_ref, o_ref):
    x = x_ref[...].astype(jnp.float32)      # (row_tile, L)
    m = m_ref[...].astype(jnp.float32)      # (row_tile, L)
    w = w_ref[...].astype(jnp.float32)      # (row_tile, 1) -> broadcasts over lanes
    o_ref[...] = (x + w * (m - x)).astype(o_ref.dtype)


# --------------------------------------------------------------------------- #
# Generation-aware tiling helpers                                             #
# --------------------------------------------------------------------------- #
def _vmem_budgets():
    """Return (block_budget_bytes, vmem_limit_bytes) sized per TPU generation.

    Footprint = 3 full-size slabs (x, matched, out) x 2 pipeline buffers each,
    plus tiny per-row weight blocks.  v5e/v6e (128 MiB VMEM): 64 MiB limit,
    ~8 MiB blocks.  v7x (64 MiB VMEM): 48 MiB limit, ~6 MiB blocks.
    """
    try:
        cap = pltpu.get_tpu_info().vmem_capacity_bytes
    except Exception:
        cap = 64 * 1024 * 1024                      # conservative (v7x-sized) fallback
    vmem_limit = min(64 * 1024 * 1024, (cap * 3) // 4)
    block_budget = max(1 << 20, (vmem_limit * 3 // 4) // 6)
    return block_budget, vmem_limit


def _choose_layout(B, C, H, W, itemsize, block_budget):
    """Pick a 2-D (R, L) view of the (B, C, H, W) tensor for the mix kernel.

    L sits on the lane axis and is a multiple of 128 dividing C*H*W whenever
    possible (unmasked, full-width vector stores); rows of one batch element are
    contiguous so the per-row (1 - lmda) weight is exact.
    """
    per_b = C * H * W
    total = B * per_b
    if per_b % 128 == 0:
        cands = [l for l in range(128, per_b + 1, 128)
                 if per_b % l == 0 and 8 * l * itemsize <= block_budget]
        if not cands:
            cands = [128]
        wide = [l for l in cands if total // l >= 8]    # keep >= 8 sublane rows
        L = max(wide) if wide else max(cands)
    else:
        # TODO(synk): C*H*W not a multiple of 128 -> fall back to the (B*C, H*W)
        # layout; the lane dim equals the full array dim (always legal) at the
        # cost of masked partial stores on ragged widths.
        L = H * W
    R = total // L
    return R, L


def _pick_row_tile(R, L, dtype, block_budget):
    """Largest dtype-packed row tile whose (row_tile, L) block fits the budget."""
    itemsize = jnp.dtype(dtype).itemsize
    pack = 8 * max(1, 4 // itemsize)                    # 8 rows f32, 16 bf16, 32 int8
    rows_fit = block_budget // max(1, L * itemsize)
    row_tile = (rows_fit // pack) * pack
    if row_tile < pack:
        row_tile = pack
    if row_tile >= R:
        return R                                        # whole array in one block
    return row_tile


# --------------------------------------------------------------------------- #
# Forward                                                                     #
# --------------------------------------------------------------------------- #
def efdmix_forward(x, key, p=1.0, alpha=0.1, training=True, activated=True):
    """x: (B, C, H, W) NCHW, same as the PyTorch module."""
    if not training or not activated:
        return x
    # Host-side Bernoulli gate like the PyTorch module.  NOTE: under jax.jit this
    # executes once at trace time, so the apply/skip decision would be baked in;
    # keep p == 1.0 (as in the demo) or call un-jitted for per-call gating.
    if p < 1.0 and random.random() > p:
        return x

    B, C, H, W = x.shape
    S = H * W

    k_perm, k_beta = jax.random.split(key)
    perm = jax.random.permutation(k_perm, B)
    lmda = jax.random.beta(k_beta, alpha, alpha, (B,)).astype(jnp.float32)

    content = x.reshape(B, C, S)
    style = jax.lax.stop_gradient(content[perm])        # x.detach()[perm] in torch

    # Exact-histogram matching prep (stays in XLA):
    #   value_style = sort(style);  matched[idx_content[i]] = value_style[i]
    # One argsort + scatter replaces argsort(argsort(.)) + gather of the original.
    # TODO(synk): per-(B, C) sort / argsort / scatter have no clean Mosaic
    # lowering, so only the full-size elementwise mix below runs in Pallas.
    # (PyTorch also detaches (matched - content); forward value is identical —
    # full autodiff parity would need a custom_vjp.)
    value_style = jnp.sort(style, axis=-1)
    idx_content = jnp.argsort(content, axis=-1)
    b_idx = jnp.arange(B)[:, None, None]
    c_idx = jnp.arange(C)[None, :, None]
    matched = jnp.zeros_like(value_style).at[b_idx, c_idx, idx_content].set(
        value_style, unique_indices=True)

    # ---------------- Pallas mix kernel on a lane-dense (R, L) view ---------- #
    itemsize = jnp.dtype(x.dtype).itemsize
    block_budget, vmem_limit = _vmem_budgets()
    R, L = _choose_layout(B, C, H, W, itemsize, block_budget)
    row_tile = _pick_row_tile(R, L, x.dtype, block_budget)

    x2 = content.reshape(R, L)
    m2 = matched.reshape(R, L)
    # Per-row mixing weight; rows of one batch element are contiguous.
    w_rows = jnp.repeat((1.0 - lmda).reshape(B, 1), R // B, axis=0)   # (R, 1) f32

    grid = (pl.cdiv(R, row_tile),)
    out2 = pl.pallas_call(
        efdmix_mix_kernel,
        out_shape=jax.ShapeDtypeStruct((R, L), x.dtype),
        grid_spec=pltpu.PrefetchScalarGridSpec(
            num_scalar_prefetch=0,
            grid=grid,
            in_specs=[
                pl.BlockSpec((row_tile, L), lambda i: (i, 0)),
                pl.BlockSpec((row_tile, L), lambda i: (i, 0)),
                pl.BlockSpec((row_tile, 1), lambda i: (i, 0)),
            ],
            out_specs=pl.BlockSpec((row_tile, L), lambda i: (i, 0)),
        ),
        # The output reuses x2's HBM slab (same shape / dtype / block mapping).
        input_output_aliases={0: 0},
        compiler_params=pltpu.CompilerParams(
            # "parallel" lets the single grid axis shard across both TensorCores
            # on multi-TC chips (v7x); it is a no-op on v5e / v6e.
            dimension_semantics=("parallel",),
            vmem_limit_bytes=int(vmem_limit),
        ),
    )(x2, m2, w_rows)
    return out2.reshape(B, C, H, W)


# --------------------------------------------------------------------------- #
# Pure-JAX reference (mirrors the PyTorch forward, same perm / lmda)          #
# --------------------------------------------------------------------------- #
def efdmix_reference(x, perm, lmda):
    B, C, H, W = x.shape
    content = x.reshape(B, C, -1)
    style = content[perm]
    value_style = jnp.sort(style, axis=-1)
    index_content = jnp.argsort(content, axis=-1)
    inverse_index = jnp.argsort(index_content, axis=-1)
    matched = jnp.take_along_axis(value_style, inverse_index, axis=-1)
    lmda3 = lmda.reshape(B, 1, 1)
    out = content + (1.0 - lmda3) * (matched - content)
    return out.reshape(B, C, H, W)


if __name__ == "__main__":
    random.seed(0)
    key = jax.random.PRNGKey(0)
    k_x, k_mod = jax.random.split(key)

    B, C, H, W = 2, 4, 16, 16
    x = jax.random.normal(k_x, (B, C, H, W), dtype=jnp.float32) * 2.0 + 0.5

    out = efdmix_forward(x, k_mod, p=1.0, alpha=0.1)
    out = jax.block_until_ready(out)

    # Cross-check against the pure-JAX reference using identical perm / lmda draws.
    k_perm, k_beta = jax.random.split(k_mod)
    perm = jax.random.permutation(k_perm, B)
    lmda = jax.random.beta(k_beta, 0.1, 0.1, (B,)).astype(jnp.float32)
    ref = efdmix_reference(x, perm, lmda)

    assert out.shape == x.shape and out.dtype == x.dtype
    assert jnp.allclose(out, ref, atol=1e-5, rtol=1e-5), "mismatch vs reference"

    print("KERNEL_OK")
</pallas_src>

<mosaic_0001>
module attributes {stable_mosaic.version = 11 : i64} {
  func.func @efdmix_mix_kernel(%arg0: i32, %arg1: memref<8x256xf32, #tpu.memory_space<vmem>>, %arg2: memref<8x256xf32, #tpu.memory_space<vmem>>, %arg3: memref<8x1xf32, #tpu.memory_space<vmem>>, %arg4: memref<8x256xf32, #tpu.memory_space<vmem>>) attributes {dimension_semantics = [#tpu.dimension_semantics<parallel>], iteration_bounds = array<i64: 1>, scalar_prefetch = 0 : i64, scratch_operands = 0 : i64, tpu.core_type = #tpu.core_type<tc>, window_params = [{transform_indices = @transform_0, window_bounds = array<i64: 8, 256>}, {transform_indices = @transform_1, window_bounds = array<i64: 8, 256>}, {transform_indices = @transform_2, window_bounds = array<i64: 8, 1>}, {transform_indices = @transform_3, window_bounds = array<i64: 8, 256>}]} {
    %c0 = arith.constant 0 : index
    %c0_0 = arith.constant 0 : index
    %0 = vector.load %arg1[%c0, %c0_0] : memref<8x256xf32, #tpu.memory_space<vmem>>, vector<8x256xf32>
    %c0_1 = arith.constant 0 : index
    %c0_2 = arith.constant 0 : index
    %1 = vector.load %arg2[%c0_1, %c0_2] : memref<8x256xf32, #tpu.memory_space<vmem>>, vector<8x256xf32>
    %c0_3 = arith.constant 0 : index
    %c0_4 = arith.constant 0 : index
    %2 = vector.load %arg3[%c0_3, %c0_4] : memref<8x1xf32, #tpu.memory_space<vmem>>, vector<8x1xf32>
    %3 = arith.subf %1, %0 : vector<8x256xf32>
    %4 = vector.broadcast %2 : vector<8x1xf32> to vector<8x256xf32>
    %5 = arith.mulf %4, %3 : vector<8x256xf32>
    %6 = arith.addf %0, %5 : vector<8x256xf32>
    %c0_5 = arith.constant 0 : index
    %c0_6 = arith.constant 0 : index
    %7 = vector.load %arg4[%c0_5, %c0_6] : memref<8x256xf32, #tpu.memory_space<vmem>>, vector<8x256xf32>
    tpu.vector_store %arg4[%c0_5, %c0_6], %6 {strides = array<i32>} : memref<8x256xf32, #tpu.memory_space<vmem>>, vector<8x256xf32>,
    return
  }
  func.func @transform_0(%arg0: i32) -> (i32, i32) {
    %c0_i32 = arith.constant 0 : i32
    %c0_i32_0 = arith.constant 0 : i32
    return %arg0, %c0_i32 : i32, i32
  }
  func.func @transform_1(%arg0: i32) -> (i32, i32) {
    %c0_i32 = arith.constant 0 : i32
    %c0_i32_0 = arith.constant 0 : i32
    return %arg0, %c0_i32 : i32, i32
  }
  func.func @transform_2(%arg0: i32) -> (i32, i32) {
    %c0_i32 = arith.constant 0 : i32
    %c0_i32_0 = arith.constant 0 : i32
    return %arg0, %c0_i32 : i32, i32
  }
  func.func @transform_3(%arg0: i32) -> (i32, i32) {
    %c0_i32 = arith.constant 0 : i32
    %c0_i32_0 = arith.constant 0 : i32
    return %arg0, %c0_i32 : i32, i32
  }
}

</mosaic_0001>

<llo_original>
// kernel: tpu_custom_call.1
$region0: #{tpu_custom_call.1}
  #allocation0 [shape = 'u32[]', space=smem, size = 0x4, offset = 0x4, fixed_abs, tag = 'smem constant byte address 0x4 - core index']
  #allocation1 [shape = 'u32[72,128]{1,0:T(1,128)}', space=vmem, size = 0x9000, scoped, tag = 'internal scratch']
  %s0 = inlined_call_operand.hbm [shape: f32[8,256], index: 0, kind: input, shape index: {}, may-alias: {0,3}]
  %s1 = inlined_call_operand.vmem [shape: f32[8,256], index: 1, kind: input, shape index: {}]
  %s2 = inlined_call_operand.vmem [shape: f32[8,1], index: 2, kind: input, shape index: {}]
  %s3 = inlined_call_operand.hbm [shape: f32[8,256], index: 3, kind: output, shape index: {}, may-alias: {0,3}]
  %s4 = sld [smem:[#allocation0]]
  $region26: #{tpu_custom_call.1} parent=0
    _
  %s6 = ssub.s32 1, %s4
  %s7 = scalar_select 0, %s6, %s4
  $region1: #{tpu_custom_call.1} parent=0
    #allocation2 [shape = 'u8[8192]{0}', space=vmem, size = 0x2000, scoped, tag = 'input window, operand 0, single buffered']
    #allocation3 [shape = 's32[1]{0}', space=sflag, size = 0x4, scoped, tag = 'scoped memory for tpu_custom_call.1']
    #allocation4 [shape = 's32[1]{0}', space=sflag, size = 0x4, scoped, tag = 'scoped memory for tpu_custom_call.1']
    #allocation5 [shape = 'u8[8192]{0}', space=vmem, size = 0x2000, scoped, tag = 'output window, operand 0, single buffered']
    %8 = vsyncpa [#allocation3], 0
    %9 = vsyncpa [#allocation4], 0
    // Predicated region
    $region2: #{tpu_custom_call.1} parent=1 // pred_check
      _
    $region3: #{tpu_custom_call.1} parent=1 // pred_check_branch
      %11 = sbr.rel (0) target = $region5
    $region4: #{tpu_custom_call.1} parent=1 // pred_region
      %13 = vsyncadd [#allocation3], 0
      %s15 = sshll.u32 %s0, 4
      %s16 = int_to_ptr.hbm [resolvable:$true] %s15
      %s17 = sshll.u32 [#allocation2], 4
      %s18 = int_to_ptr.vmem [resolvable:$true] %s17
      %20 = dma.hbm_to_vmem [thread:$0]  %s16, 256, %s18, [#allocation3]
    $region5: #{tpu_custom_call.1} parent=1 // pred_fallthru
      _
    // Predicated region
    $region6: #{tpu_custom_call.1} parent=1 // pred_check
      _
    $region7: #{tpu_custom_call.1} parent=1 // pred_check_branch
      %22 = sbr.rel (0) target = $region9
    $region8: #{tpu_custom_call.1} parent=1 // pred_region
      _
    $region9: #{tpu_custom_call.1} parent=1 // pred_fallthru
      _
    // Predicated region
    $region10: #{tpu_custom_call.1} parent=1 // pred_check
      _
    $region11: #{tpu_custom_call.1} parent=1 // pred_check_branch
      %24 = sbr.rel (0) target = $region13
    $region12: #{tpu_custom_call.1} parent=1 // pred_region
      _
    $region13: #{tpu_custom_call.1} parent=1 // pred_fallthru
      _
    // Predicated region
    $region14: #{tpu_custom_call.1} parent=1 // pred_check
      _
    $region15: #{tpu_custom_call.1} parent=1 // pred_check_branch
      %26 = sbr.rel (0) target = $region17
    $region16: #{tpu_custom_call.1} parent=1 // pred_region
      %28 = dma.done [#allocation3], 256
    $region17: #{tpu_custom_call.1} parent=1 // pred_fallthru
      _
    %v29 = vld [vmem:[#allocation2] sm:$0xff]
    %v30 = vld [vmem:[#allocation2 + $0x8] sm:$0xff]
    %v31 = vld [vmem:[%s1] sm:$0xff]
    %v32 = vld [vmem:[%s1 + $0x8] sm:$0xff]
    %v33 = vld [vmem:[%s2] sm:$0xff]
    %v34 = vsub.f32 %v31, %v29
    %v35 = vsub.f32 %v32, %v30
    %37 = vset.pattern.permute.xlu0 0
    %38 = vperm.xlu0 %37, %v33
    %v39 = vpop.permute.xlu0 %38
    %v41 = vmul.f32 %v39, %v34
    %v42 = vmul.f32 %v39, %v35
    %v43 = vadd.f32 %v29, %v41
    %v44 = vadd.f32 %v30, %v42
    %45 = vst [vmem:[#allocation5] sm:$0xff] %v43
    %46 = vst [vmem:[#allocation5 + $0x8] sm:$0xff] %v44
    // Predicated region
    $region18: #{tpu_custom_call.1} parent=1 // pred_check
      _
    $region19: #{tpu_custom_call.1} parent=1 // pred_check_branch
      %48 = sbr.rel (0) target = $region21
    $region20: #{tpu_custom_call.1} parent=1 // pred_region
      %50 = vsyncadd [#allocation4], 0
      %s52 = sshll.u32 [#allocation5], 4
      %s53 = int_to_ptr.vmem [resolvable:$true] %s52
      %s54 = sshll.u32 %s3, 4
      %s55 = int_to_ptr.hbm [resolvable:$true] %s54
      %57 = dma.vmem_to_hbm [thread:$0]  %s53, 256, %s55, [#allocation4]
    $region21: #{tpu_custom_call.1} parent=1 // pred_fallthru
      _
    // Predicated region
    $region22: #{tpu_custom_call.1} parent=1 // pred_check
      _
    $region23: #{tpu_custom_call.1} parent=1 // pred_check_branch
      %59 = sbr.rel (0) target = $region25
    $region24: #{tpu_custom_call.1} parent=1 // pred_region
      %61 = dma.done [#allocation4], 256
    $region25: #{tpu_custom_call.1} parent=1 // pred_fallthru
      _
    %62 = vsyncpa [#allocation3], 1
    %63 = vsyncpa [#allocation4], 1

</llo_original>
